<compile_context>
chip_gen: v7x
topology: tpu7x:2x2x1
jax: 0.10.0
libtpu: 0.0.40
codegen_flags: <defaults>
</compile_context>

<pallas_src>
import jax
import jax.numpy as jnp
from jax.experimental import pallas as pl
from jax.experimental.pallas import tpu as pltpu

IN_DIM = 784
BATCH_TILE = 128   # fills an MXU pass; batch padded up to a multiple of this
OUT_PAD = 128      # lane-dense output tile (unmasked vst); sliced back to 10


def mlp_kernel(x_ref, w1_ref, b1_ref, w2_ref, b2_ref, o_ref):
    # First linear: (TB, 784)bf16 @ (784, H)bf16 -> f32 accumulation on the MXU.
    h = jnp.dot(x_ref[...], w1_ref[...], preferred_element_type=jnp.float32)
    # Bias + ReLU in f32 on the VPU (v5e has no bf16 VALU; negligible cost).
    h = jnp.maximum(h + b1_ref[...], 0.0)
    # Second linear: cast activations to bf16 for the MXU, accumulate in f32.
    out = jnp.dot(h.astype(w2_ref.dtype), w2_ref[...],
                  preferred_element_type=jnp.float32)
    o_ref[...] = (out + b2_ref[...]).astype(o_ref.dtype)


def mlp_forward(x, w1, b1, w2, b2):
    """x: (B, 784) f32; w1: (784, H); b1: (H,) or (1, H); w2: (H, 10); b2: (10,) or (1, 10)."""
    B, K = x.shape
    H = w1.shape[1]
    out_dim = w2.shape[1]

    b1 = b1.reshape(1, H).astype(jnp.float32)
    b2 = b2.reshape(1, out_dim).astype(jnp.float32)

    # Pad batch to a multiple of the 128-row tile and output lanes to 128.
    B_pad = pl.cdiv(B, BATCH_TILE) * BATCH_TILE
    N_pad = max(OUT_PAD, pl.cdiv(out_dim, 128) * 128)

    x_p = jnp.pad(x, ((0, B_pad - B), (0, 0))).astype(jnp.bfloat16)
    w1_b = w1.astype(jnp.bfloat16)
    w2_p = jnp.pad(w2, ((0, 0), (0, N_pad - out_dim))).astype(jnp.bfloat16)
    b2_p = jnp.pad(b2, ((0, 0), (0, N_pad - out_dim)))

    grid = (B_pad // BATCH_TILE,)

    flops = 2 * B_pad * K * H + 2 * B_pad * H * N_pad
    bytes_accessed = (x_p.size * 2 + w1_b.size * 2 + w2_p.size * 2
                      + b1.size * 4 + b2_p.size * 4 + B_pad * N_pad * 4)

    out_padded = pl.pallas_call(
        mlp_kernel,
        out_shape=jax.ShapeDtypeStruct((B_pad, N_pad), jnp.float32),
        grid=grid,
        in_specs=[
            pl.BlockSpec((BATCH_TILE, K), lambda i: (i, 0)),  # x tile (pipelined)
            pl.BlockSpec((K, H), lambda i: (0, 0)),           # w1: VMEM-resident
            pl.BlockSpec((1, H), lambda i: (0, 0)),           # b1: VMEM-resident
            pl.BlockSpec((H, N_pad), lambda i: (0, 0)),       # w2: VMEM-resident
            pl.BlockSpec((1, N_pad), lambda i: (0, 0)),       # b2: VMEM-resident
        ],
        out_specs=pl.BlockSpec((BATCH_TILE, N_pad), lambda i: (i, 0)),
        compiler_params=pltpu.CompilerParams(
            # Batch tiles are independent -> v7x shards them over its 2 TCs.
            dimension_semantics=("parallel",),
        ),
        cost_estimate=pl.CostEstimate(
            flops=flops, transcendentals=0, bytes_accessed=bytes_accessed),
    )(x_p, w1_b, b1, w2_p, b2_p)

    # Slice away the batch padding and the lane padding of the output.
    return out_padded[:B, :out_dim]


if __name__ == "__main__":
    key = jax.random.PRNGKey(0)
    k_x, k_w1, k_b1, k_w2, k_b2 = jax.random.split(key, 5)

    batch = 200          # exercises 2 batch tiles + batch padding (200 -> 256)
    in_dim = IN_DIM      # fixed by the module (28*28 MNIST)
    hidden = 32
    out_dim = 10

    # Deterministic synthetic parameters (mimic nn.Linear's uniform fan-in init).
    x = jax.random.normal(k_x, (batch, in_dim), dtype=jnp.float32)
    lim1 = 1.0 / jnp.sqrt(in_dim)
    w1 = jax.random.uniform(k_w1, (in_dim, hidden), jnp.float32, -lim1, lim1)
    b1 = jax.random.uniform(k_b1, (1, hidden), jnp.float32, -lim1, lim1)
    lim2 = 1.0 / jnp.sqrt(hidden)
    w2 = jax.random.uniform(k_w2, (hidden, out_dim), jnp.float32, -lim2, lim2)
    b2 = jax.random.uniform(k_b2, (1, out_dim), jnp.float32, -lim2, lim2)

    out = jax.block_until_ready(mlp_forward(x, w1, b1, w2, b2))
    assert out.shape == (batch, out_dim)

    # Precision-matched reference (bf16 operands, f32 accumulation) -> tight check.
    xb, w1b, w2b = (x.astype(jnp.bfloat16), w1.astype(jnp.bfloat16),
                    w2.astype(jnp.bfloat16))
    h_ref = jnp.maximum(
        jnp.dot(xb, w1b, preferred_element_type=jnp.float32) + b1, 0.0)
    ref_bf16 = jnp.dot(h_ref.astype(jnp.bfloat16), w2b,
                       preferred_element_type=jnp.float32) + b2
    assert jnp.allclose(out, ref_bf16, atol=1e-3, rtol=1e-3), \
        "mismatch vs precision-matched reference"

    # Full-f32 reference -> loose check (bf16 operands on K=784 contraction).
    ref_f32 = jnp.maximum(x @ w1 + b1, 0.0) @ w2 + b2
    assert jnp.allclose(out, ref_f32, atol=3e-2, rtol=3e-2), \
        "mismatch vs f32 reference"

    print("KERNEL_OK")
</pallas_src>

<mosaic_0001>
module attributes {stable_mosaic.version = 11 : i64} {
  func.func @mlp_kernel(%arg0: i32, %arg1: memref<128x784xbf16, #tpu.memory_space<vmem>>, %arg2: memref<784x32xbf16, #tpu.memory_space<vmem>>, %arg3: memref<1x32xf32, #tpu.memory_space<vmem>>, %arg4: memref<32x128xbf16, #tpu.memory_space<vmem>>, %arg5: memref<1x128xf32, #tpu.memory_space<vmem>>, %arg6: memref<128x128xf32, #tpu.memory_space<vmem>>) attributes {dimension_semantics = [#tpu.dimension_semantics<parallel>], iteration_bounds = array<i64: 2>, scalar_prefetch = 0 : i64, scratch_operands = 0 : i64, tpu.core_type = #tpu.core_type<tc>, window_params = [{transform_indices = @transform_0, window_bounds = array<i64: 128, 784>}, {pipeline_mode = #tpu.pipeline_mode<synchronous>, transform_indices = @transform_1, window_bounds = array<i64: 784, 32>}, {pipeline_mode = #tpu.pipeline_mode<synchronous>, transform_indices = @transform_2, window_bounds = array<i64: 1, 32>}, {pipeline_mode = #tpu.pipeline_mode<synchronous>, transform_indices = @transform_3, window_bounds = array<i64: 32, 128>}, {pipeline_mode = #tpu.pipeline_mode<synchronous>, transform_indices = @transform_4, window_bounds = array<i64: 1, 128>}, {transform_indices = @transform_5, window_bounds = array<i64: 128, 128>}]} {
    %c0 = arith.constant 0 : index
    %c0_0 = arith.constant 0 : index
    %0 = vector.load %arg1[%c0, %c0_0] : memref<128x784xbf16, #tpu.memory_space<vmem>>, vector<128x784xbf16>
    %c0_1 = arith.constant 0 : index
    %c0_2 = arith.constant 0 : index
    %1 = vector.load %arg2[%c0_1, %c0_2] : memref<784x32xbf16, #tpu.memory_space<vmem>>, vector<784x32xbf16>
    %cst = arith.constant dense<0.000000e+00> : vector<128x32xf32>
    %2 = tpu.matmul %0, %1, %cst {dimension_numbers = #tpu.dot_dimension_numbers<[1], [0], [0], [1], [0, 0, 1, 1], [], []>} : vector<128x784xbf16>, vector<784x32xbf16>, vector<128x32xf32> -> vector<128x32xf32>
    %c0_3 = arith.constant 0 : index
    %c0_4 = arith.constant 0 : index
    %3 = vector.load %arg3[%c0_3, %c0_4] : memref<1x32xf32, #tpu.memory_space<vmem>>, vector<1x32xf32>
    %4 = vector.broadcast %3 : vector<1x32xf32> to vector<128x32xf32>
    %5 = arith.addf %2, %4 : vector<128x32xf32>
    %cst_5 = arith.constant 0.000000e+00 : f32
    %6 = vector.broadcast %cst_5 : f32 to vector<128x32xf32>
    %7 = arith.maximumf %5, %6 : vector<128x32xf32>
    %8 = arith.truncf %7 : vector<128x32xf32> to vector<128x32xbf16>
    %c0_6 = arith.constant 0 : index
    %c0_7 = arith.constant 0 : index
    %9 = vector.load %arg4[%c0_6, %c0_7] : memref<32x128xbf16, #tpu.memory_space<vmem>>, vector<32x128xbf16>
    %cst_8 = arith.constant dense<0.000000e+00> : vector<128x128xf32>
    %10 = tpu.matmul %8, %9, %cst_8 {dimension_numbers = #tpu.dot_dimension_numbers<[1], [0], [0], [1], [0, 0, 1, 1], [], []>} : vector<128x32xbf16>, vector<32x128xbf16>, vector<128x128xf32> -> vector<128x128xf32>
    %c0_9 = arith.constant 0 : index
    %c0_10 = arith.constant 0 : index
    %11 = vector.load %arg5[%c0_9, %c0_10] : memref<1x128xf32, #tpu.memory_space<vmem>>, vector<1x128xf32>
    %12 = vector.broadcast %11 : vector<1x128xf32> to vector<128x128xf32>
    %13 = arith.addf %10, %12 : vector<128x128xf32>
    %c0_11 = arith.constant 0 : index
    %c0_12 = arith.constant 0 : index
    %14 = vector.load %arg6[%c0_11, %c0_12] : memref<128x128xf32, #tpu.memory_space<vmem>>, vector<128x128xf32>
    tpu.vector_store %arg6[%c0_11, %c0_12], %13 {strides = array<i32>} : memref<128x128xf32, #tpu.memory_space<vmem>>, vector<128x128xf32>,
    return
  }
  func.func @transform_0(%arg0: i32) -> (i32, i32) {
    %c0_i32 = arith.constant 0 : i32
    %c0_i32_0 = arith.constant 0 : i32
    return %arg0, %c0_i32 : i32, i32
  }
  func.func @transform_1(%arg0: i32) -> (i32, i32) {
    %c0_i32 = arith.constant 0 : i32
    %c0_i32_0 = arith.constant 0 : i32
    %c0_i32_1 = arith.constant 0 : i32
    return %c0_i32, %c0_i32_0 : i32, i32
  }
  func.func @transform_2(%arg0: i32) -> (i32, i32) {
    %c0_i32 = arith.constant 0 : i32
    %c0_i32_0 = arith.constant 0 : i32
    %c0_i32_1 = arith.constant 0 : i32
    return %c0_i32, %c0_i32_0 : i32, i32
  }
  func.func @transform_3(%arg0: i32) -> (i32, i32) {
    %c0_i32 = arith.constant 0 : i32
    %c0_i32_0 = arith.constant 0 : i32
    %c0_i32_1 = arith.constant 0 : i32
    return %c0_i32, %c0_i32_0 : i32, i32
  }
  func.func @transform_4(%arg0: i32) -> (i32, i32) {
    %c0_i32 = arith.constant 0 : i32
    %c0_i32_0 = arith.constant 0 : i32
    %c0_i32_1 = arith.constant 0 : i32
    return %c0_i32, %c0_i32_0 : i32, i32
  }
  func.func @transform_5(%arg0: i32) -> (i32, i32) {
    %c0_i32 = arith.constant 0 : i32
    %c0_i32_0 = arith.constant 0 : i32
    return %arg0, %c0_i32 : i32, i32
  }
}

</mosaic_0001>

<llo_original>
// kernel: tpu_custom_call.1
$region0: #{tpu_custom_call.1}
  #allocation0 [shape = 'u32[]', space=smem, size = 0x4, offset = 0x4, fixed_abs, tag = 'smem constant byte address 0x4 - core index']
  #allocation1 [shape = 'u32[144,128]{1,0:T(1,128)}', space=vmem, size = 0x12000, scoped, tag = 'internal scratch']
  %s0 = inlined_call_operand.vmem [shape: bf16[256,784], index: 0, kind: input, shape index: {}]
  %s1 = inlined_call_operand.vmem [shape: bf16[784,32], index: 1, kind: input, shape index: {}]
  %s2 = inlined_call_operand.vmem [shape: f32[1,32], index: 2, kind: input, shape index: {}]
  %s3 = inlined_call_operand.vmem [shape: bf16[32,128], index: 3, kind: input, shape index: {}]
  %s4 = inlined_call_operand.vmem [shape: f32[1,128], index: 4, kind: input, shape index: {}]
  %s5 = inlined_call_operand.hbm [shape: f32[256,128], index: 5, kind: output, shape index: {}]
  %s6 = sld [smem:[#allocation0]]
  $region53: #{tpu_custom_call.1} parent=0
    _
  %s8 = ssub.s32 1, %s6
  %s9 = scalar_select 0, %s8, %s6
  $region1: #{tpu_custom_call.1} parent=0
    #allocation2 [shape = 'u8[131072]{0}', space=vmem, size = 0x20000, scoped, tag = 'output window, operand 0']
    #allocation3 [shape = 's32[2]{0}', space=sflag, size = 0x8, scoped, tag = 'scoped memory for tpu_custom_call.1']
    %10 = vsyncpa [#allocation3], 0
    %s11 = scalar_lea.sflag [#allocation3], 1
    %12 = vsyncpa %s11, 0
    loop: start=0, step=1, limit=4
    $region2: #{tpu_custom_call.1} parent=1 // loop_pre_header
      _
    $region3: #{tpu_custom_call.1} parent=1 // loop_header
      %s14 = sphi 0, %s18
      %p15 = scmp.ge.s32.totalorder %s14, 4
      %s24 = sphi 0, %s26
      %s27 = sphi 0, %s24
      %s28 = sphi 0, %s27
      %s44 = sphi 0, %s28
      %s48 = sphi 0, %s48
      %s50 = sphi 0, %s48
      %s51 = sphi 0, %s50
      %s65 = sphi 0, %s51
      %s69 = sphi 0, %s69
      %s71 = sphi 0, %s69
      %s72 = sphi 0, %s71
      %s86 = sphi 0, %s72
      %s90 = sphi 0, %s90
      %s92 = sphi 0, %s90
      %s93 = sphi 0, %s92
      %s107 = sphi 0, %s93
      %s111 = sphi 0, %s111
      %s113 = sphi 0, %s111
      %s114 = sphi 0, %s113
      %s128 = sphi 0, %s114
      %s134 = sphi 0, %s136
      %s137 = sphi 0, %s134
      %s138 = sphi 0, %s137
      %s154 = sphi 0, %s138
    $region4: #{tpu_custom_call.1} parent=1 // loop_header_branch
      %17 = sbr.rel (%p15) target = $region8
    $region5: #{tpu_custom_call.1} parent=1 // loop_body
      %s19 = ssub.s32 %s14, 1
      %s20 = ssub.s32 %s14, 2
      %s21 = sadd.s32 %s14, 1
      %s22 = ssub.s32 %s14, %s21
      %p23 = scmp.eq.s32.totalorder %s22, 0
      %s25 = sadd.s32 %s24, 1
      %s26 = scalar_select %p23, %s24, %s25
      %p29 = pneg %p23
      %p30 = scmp.eq.s32.totalorder %s14, 1
      %p31 = por %p29, %p30
      %p32 = scmp.ne.s32.totalorder %s24, %s27
      %p33 = scmp.eq.s32.totalorder %s14, 0
      %p34 = por %p32, %p33
      %p35 = scmp.ne.s32.totalorder %s24, %s27
      %p36 = scmp.eq.s32.totalorder %s19, 1
      %p37 = por %p35, %p36
      %p38 = scmp.ne.s32.totalorder %s27, %s28
      %p39 = scmp.eq.s32.totalorder %s19, 0
      %p40 = por %p38, %p39
      %p41 = scmp.ne.s32.totalorder %s27, %s28
      %p42 = scmp.eq.s32.totalorder %s20, 1
      %p43 = por %p41, %p42
      %p45 = scmp.ne.s32.totalorder %s28, %s44
      %p46 = scmp.eq.s32.totalorder %s20, 0
      %p47 = por %p45, %p46
      %s49 = sadd.s32 %s48, 1
      %p52 = scmp.eq.s32.totalorder %s14, 1
      %p53 = scmp.ne.s32.totalorder %s48, %s50
      %p54 = scmp.eq.s32.totalorder %s14, 0
      %p55 = por %p53, %p54
      %p56 = scmp.ne.s32.totalorder %s48, %s50
      %p57 = scmp.eq.s32.totalorder %s19, 1
      %p58 = por %p56, %p57
      %p59 = scmp.ne.s32.totalorder %s50, %s51
      %p60 = scmp.eq.s32.totalorder %s19, 0
      %p61 = por %p59, %p60
      %p62 = scmp.ne.s32.totalorder %s50, %s51
      %p63 = scmp.eq.s32.totalorder %s20, 1
      %p64 = por %p62, %p63
      %p66 = scmp.ne.s32.totalorder %s51, %s65
      %p67 = scmp.eq.s32.totalorder %s20, 0
      %p68 = por %p66, %p67
      %s70 = sadd.s32 %s69, 1
      %p73 = scmp.eq.s32.totalorder %s14, 1
      %p74 = scmp.ne.s32.totalorder %s69, %s71
      %p75 = scmp.eq.s32.totalorder %s14, 0
      %p76 = por %p74, %p75
      %p77 = scmp.ne.s32.totalorder %s69, %s71
      %p78 = scmp.eq.s32.totalorder %s19, 1
      %p79 = por %p77, %p78
      %p80 = scmp.ne.s32.totalorder %s71, %s72
      %p81 = scmp.eq.s32.totalorder %s19, 0
      %p82 = por %p80, %p81
      %p83 = scmp.ne.s32.totalorder %s71, %s72
      %p84 = scmp.eq.s32.totalorder %s20, 1
      %p85 = por %p83, %p84
      %p87 = scmp.ne.s32.totalorder %s72, %s86
      %p88 = scmp.eq.s32.totalorder %s20, 0
      %p89 = por %p87, %p88
      %s91 = sadd.s32 %s90, 1
      %p94 = scmp.eq.s32.totalorder %s14, 1
      %p95 = scmp.ne.s32.totalorder %s90, %s92
      %p96 = scmp.eq.s32.totalorder %s14, 0
      %p97 = por %p95, %p96
      %p98 = scmp.ne.s32.totalorder %s90, %s92
      %p99 = scmp.eq.s32.totalorder %s19, 1
      %p100 = por %p98, %p99
      %p101 = scmp.ne.s32.totalorder %s92, %s93
      %p102 = scmp.eq.s32.totalorder %s19, 0
      %p103 = por %p101, %p102
      %p104 = scmp.ne.s32.totalorder %s92, %s93
      %p105 = scmp.eq.s32.totalorder %s20, 1
      %p106 = por %p104, %p105
      %p108 = scmp.ne.s32.totalorder %s93, %s107
      %p109 = scmp.eq.s32.totalorder %s20, 0
      %p110 = por %p108, %p109
      %s112 = sadd.s32 %s111, 1
      %p115 = scmp.eq.s32.totalorder %s14, 1
      %p116 = scmp.ne.s32.totalorder %s111, %s113
      %p117 = scmp.eq.s32.totalorder %s14, 0
      %p118 = por %p116, %p117
      %p119 = scmp.ne.s32.totalorder %s111, %s113
      %p120 = scmp.eq.s32.totalorder %s19, 1
      %p121 = por %p119, %p120
      %p122 = scmp.ne.s32.totalorder %s113, %s114
      %p123 = scmp.eq.s32.totalorder %s19, 0
      %p124 = por %p122, %p123
      %p125 = scmp.ne.s32.totalorder %s113, %s114
      %p126 = scmp.eq.s32.totalorder %s20, 1
      %p127 = por %p125, %p126
      %p129 = scmp.ne.s32.totalorder %s114, %s128
      %p130 = scmp.eq.s32.totalorder %s20, 0
      %p131 = por %p129, %p130
      %s132 = ssub.s32 %s14, %s21
      %p133 = scmp.eq.s32.totalorder %s132, 0
      %s135 = sadd.s32 %s134, 1
      %s136 = scalar_select %p133, %s134, %s135
      %p139 = pneg %p133
      %p140 = scmp.eq.s32.totalorder %s14, 1
      %p141 = por %p139, %p140
      %p142 = scmp.ne.s32.totalorder %s134, %s137
      %p143 = scmp.eq.s32.totalorder %s14, 0
      %p144 = por %p142, %p143
      %p145 = scmp.ne.s32.totalorder %s134, %s137
      %p146 = scmp.eq.s32.totalorder %s19, 1
      %p147 = por %p145, %p146
      %p148 = scmp.ne.s32.totalorder %s137, %s138
      %p149 = scmp.eq.s32.totalorder %s19, 0
      %p150 = por %p148, %p149
      %p151 = scmp.ne.s32.totalorder %s137, %s138
      %p152 = scmp.eq.s32.totalorder %s20, 1
      %p153 = por %p151, %p152
      %p155 = scmp.ne.s32.totalorder %s138, %s154
      %p156 = scmp.eq.s32.totalorder %s20, 0
      %p157 = por %p155, %p156
      %p158 = scmp.le.s32.totalorder 1, %s14
      %p159 = scmp.lt.s32.totalorder %s14, 3
      %p160 = pnand %p158, %p159
      %p161 = pneg %p160
      // Predicated region
      $region9: #{tpu_custom_call.1} parent=5 // pred_check
        _
      $region10: #{tpu_custom_call.1} parent=5 // pred_check_branch
        %163 = sbr.rel (%p160) target = $region12
      $region11: #{tpu_custom_call.1} parent=5 // pred_region
        %s164 = ssub.s32 %s14, 1
        // Predicated region
        $region13: #{tpu_custom_call.1} parent=11 // pred_check
          %p165 = pneg %p61
        $region14: #{tpu_custom_call.1} parent=11 // pred_check_branch
          %167 = sbr.rel (%p165) target = $region16
        $region15: #{tpu_custom_call.1} parent=11 // pred_region
          _
        $region16: #{tpu_custom_call.1} parent=11 // pred_fallthru
          _
        // Predicated region
        $region17: #{tpu_custom_call.1} parent=11 // pred_check
          %p168 = pneg %p82
        $region18: #{tpu_custom_call.1} parent=11 // pred_check_branch
          %170 = sbr.rel (%p168) target = $region20
        $region19: #{tpu_custom_call.1} parent=11 // pred_region
          _
        $region20: #{tpu_custom_call.1} parent=11 // pred_fallthru
          _
        // Predicated region
        $region21: #{tpu_custom_call.1} parent=11 // pred_check
          %p171 = pneg %p103
        $region22: #{tpu_custom_call.1} parent=11 // pred_check_branch
          %173 = sbr.rel (%p171) target = $region24
        $region23: #{tpu_custom_call.1} parent=11 // pred_region
          _
        $region24: #{tpu_custom_call.1} parent=11 // pred_fallthru
          _
        // Predicated region
        $region25: #{tpu_custom_call.1} parent=11 // pred_check
          %p174 = pneg %p124
        $region26: #{tpu_custom_call.1} parent=11 // pred_check_branch
          %176 = sbr.rel (%p174) target = $region28
        $region27: #{tpu_custom_call.1} parent=11 // pred_region
          _
        $region28: #{tpu_custom_call.1} parent=11 // pred_fallthru
          _
      $region12: #{tpu_custom_call.1} parent=5 // pred_fallthru
        _
      %p177 = scmp.lt.s32.totalorder %s14, 2
      // Predicated region
      $region29: #{tpu_custom_call.1} parent=5 // pred_check
        %p178 = pneg %p177
      $region30: #{tpu_custom_call.1} parent=5 // pred_check_branch
        %180 = sbr.rel (%p178) target = $region32
      $region31: #{tpu_custom_call.1} parent=5 // pred_region
        // Predicated region
        $region33: #{tpu_custom_call.1} parent=31 // pred_check
          %p181 = pneg %p34
        $region34: #{tpu_custom_call.1} parent=31 // pred_check_branch
          %183 = sbr.rel (%p181) target = $region36
        $region35: #{tpu_custom_call.1} parent=31 // pred_region
          %s184 = smul.u32 16, %s14
          %p185 = scmp.lt.s32.totalorder %s184, 31
          %s186 = scalar_select %p185, %s184, 31
          %s187 = smul.addr %s186, 7
          %s188 = smul.addr %s187, 4
          %s189 = scalar_lea.vmem %s0, %s188
          %s190 = smul.u32 16, %s14
        $region36: #{tpu_custom_call.1} parent=31 // pred_fallthru
          _
      $region32: #{tpu_custom_call.1} parent=5 // pred_fallthru
        _
      %p191 = scmp.le.s32.totalorder 1, %s14
      %p192 = scmp.lt.s32.totalorder %s14, 3
      %p193 = pnand %p191, %p192
      %p194 = pneg %p193
      // Predicated region
      $region37: #{tpu_custom_call.1} parent=5 // pred_check
        _
      $region38: #{tpu_custom_call.1} parent=5 // pred_check_branch
        %196 = sbr.rel (%p193) target = $region40
      $region39: #{tpu_custom_call.1} parent=5 // pred_region
        %s197 = ssub.s32 %s14, 1
        %s198 = smul.u32 16, %s19
        %p199 = scmp.lt.s32.totalorder %s198, 31
        %s200 = scalar_select %p199, %s198, 31
        %s201 = smul.addr %s200, 7
        %s202 = smul.addr %s201, 4
        %s203 = scalar_lea.vmem %s0, %s202
        %p204 = pneg %p40
        %p205 = pneg %p37
        %p206 = pneg %p61
        %p207 = pneg %p58
        %p208 = pneg %p82
        %p209 = pneg %p79
        %p210 = pneg %p103
        %p211 = pneg %p100
        %p212 = pneg %p124
        %p213 = pneg %p121
        %p214 = pneg %p150
        %p215 = pneg %p147
        %s216 = sand.u32 %s137, 1
        %s217 = scalar_lea.sflag [#allocation3], %s216
        %s218 = sand.u32 %s137, 1
        %s219 = smul.addr %s218, 128
        %s220 = scalar_lea.vmem [#allocation2], %s219
        %s221 = smul.u32 16, %s19
        %p222 = scmp.lt.s32.totalorder %s221, 31
        %s223 = scalar_select %p222, %s221, 31
        %s224 = smul.addr %s223, 7
        %s225 = smul.addr %s224, 4
        %s226 = scalar_lea.vmem %s0, %s225
        %s227 = smul.u32 16, %s19
        %s228 = smul.u32 16, %s19
        %v230 = vld [vmem:[%s226] sm:$0xff]
        %v231 = vld [vmem:[%s226 + $0x8] sm:$0xff]
        %v232 = vld [vmem:[%s226 + $0x10] sm:$0xff]
        %v233 = vld [vmem:[%s226 + $0x18] sm:$0xf]
        %v234 = vld [vmem:[%s226 + $0x1c] sm:$0xff]
        %v235 = vld [vmem:[%s226 + $0x24] sm:$0xff]
        %v236 = vld [vmem:[%s226 + $0x2c] sm:$0xff]
        %v237 = vld [vmem:[%s226 + $0x34] sm:$0xf]
        %v238 = vld [vmem:[%s226 + $0x38] sm:$0xff]
        %v239 = vld [vmem:[%s226 + $0x40] sm:$0xff]
        %v240 = vld [vmem:[%s226 + $0x48] sm:$0xff]
        %v241 = vld [vmem:[%s226 + $0x50] sm:$0xf]
        %v242 = vld [vmem:[%s226 + $0x54] sm:$0xff]
        %v243 = vld [vmem:[%s226 + $0x5c] sm:$0xff]
        %v244 = vld [vmem:[%s226 + $0x64] sm:$0xff]
        %v245 = vld [vmem:[%s226 + $0x6c] sm:$0xf]
        %v246 = vld [vmem:[%s226 + $0x70] sm:$0xff]
        %v247 = vld [vmem:[%s226 + $0x78] sm:$0xff]
        %v248 = vld [vmem:[%s226 + $0x80] sm:$0xff]
        %v249 = vld [vmem:[%s226 + $0x88] sm:$0xf]
        %v250 = vld [vmem:[%s226 + $0x8c] sm:$0xff]
        %v251 = vld [vmem:[%s226 + $0x94] sm:$0xff]
        %v252 = vld [vmem:[%s226 + $0x9c] sm:$0xff]
        %v253 = vld [vmem:[%s226 + $0xa4] sm:$0xf]
        %v254 = vld [vmem:[%s226 + $0xa8] sm:$0xff]
        %v255 = vld [vmem:[%s226 + $0xb0] sm:$0xff]
        %v256 = vld [vmem:[%s226 + $0xb8] sm:$0xff]
        %v257 = vld [vmem:[%s226 + $0xc0] sm:$0xf]
        %v258 = vld [vmem:[%s226 + $0xc4] sm:$0xff]
        %v259 = vld [vmem:[%s226 + $0xcc] sm:$0xff]
        %v260 = vld [vmem:[%s226 + $0xd4] sm:$0xff]
        %v261 = vld [vmem:[%s226 + $0xdc] sm:$0xf]
        %v262 = vld [vmem:[%s226 + $0xe0] sm:$0xff]
        %v263 = vld [vmem:[%s226 + $0xe8] sm:$0xff]
        %v264 = vld [vmem:[%s226 + $0xf0] sm:$0xff]
        %v265 = vld [vmem:[%s226 + $0xf8] sm:$0xf]
        %v266 = vld [vmem:[%s226 + $0xfc] sm:$0xff]
        %v267 = vld [vmem:[%s226 + $0x104] sm:$0xff]
        %v268 = vld [vmem:[%s226 + $0x10c] sm:$0xff]
        %v269 = vld [vmem:[%s226 + $0x114] sm:$0xf]
        %v270 = vld [vmem:[%s226 + $0x118] sm:$0xff]
        %v271 = vld [vmem:[%s226 + $0x120] sm:$0xff]
        %v272 = vld [vmem:[%s226 + $0x128] sm:$0xff]
        %v273 = vld [vmem:[%s226 + $0x130] sm:$0xf]
        %v274 = vld [vmem:[%s226 + $0x134] sm:$0xff]
        %v275 = vld [vmem:[%s226 + $0x13c] sm:$0xff]
        %v276 = vld [vmem:[%s226 + $0x144] sm:$0xff]
        %v277 = vld [vmem:[%s226 + $0x14c] sm:$0xf]
        %v278 = vld [vmem:[%s226 + $0x150] sm:$0xff]
        %v279 = vld [vmem:[%s226 + $0x158] sm:$0xff]
        %v280 = vld [vmem:[%s226 + $0x160] sm:$0xff]
        %v281 = vld [vmem:[%s226 + $0x168] sm:$0xf]
        %v282 = vld [vmem:[%s226 + $0x16c] sm:$0xff]
        %v283 = vld [vmem:[%s226 + $0x174] sm:$0xff]
        %v284 = vld [vmem:[%s226 + $0x17c] sm:$0xff]
        %v285 = vld [vmem:[%s226 + $0x184] sm:$0xf]
        %v286 = vld [vmem:[%s226 + $0x188] sm:$0xff]
        %v287 = vld [vmem:[%s226 + $0x190] sm:$0xff]
        %v288 = vld [vmem:[%s226 + $0x198] sm:$0xff]
        %v289 = vld [vmem:[%s226 + $0x1a0] sm:$0xf]
        %v290 = vld [vmem:[%s226 + $0x1a4] sm:$0xff]
        %v291 = vld [vmem:[%s226 + $0x1ac] sm:$0xff]
        %v292 = vld [vmem:[%s226 + $0x1b4] sm:$0xff]
        %v293 = vld [vmem:[%s226 + $0x1bc] sm:$0xf]
        %v294 = vld [vmem:[%s1] sm:$0xf]
        %v295 = vld [vmem:[%s1 + $0x4] sm:$0xf]
        %v296 = vld [vmem:[%s1 + $0x8] sm:$0xf]
        %v297 = vld [vmem:[%s1 + $0xc] sm:$0xf]
        %v298 = vld [vmem:[%s1 + $0x10] sm:$0xf]
        %v299 = vld [vmem:[%s1 + $0x14] sm:$0xf]
        %v300 = vld [vmem:[%s1 + $0x18] sm:$0xf]
        %v301 = vld [vmem:[%s1 + $0x1c] sm:$0xf]
        %v302 = vld [vmem:[%s1 + $0x20] sm:$0xf]
        %v303 = vld [vmem:[%s1 + $0x24] sm:$0xf]
        %v304 = vld [vmem:[%s1 + $0x28] sm:$0xf]
        %v305 = vld [vmem:[%s1 + $0x2c] sm:$0xf]
        %v306 = vld [vmem:[%s1 + $0x30] sm:$0xf]
        %v307 = vld [vmem:[%s1 + $0x34] sm:$0xf]
        %v308 = vld [vmem:[%s1 + $0x38] sm:$0xf]
        %v309 = vld [vmem:[%s1 + $0x3c] sm:$0xf]
        %v310 = vld [vmem:[%s1 + $0x40] sm:$0xf]
        %v311 = vld [vmem:[%s1 + $0x44] sm:$0xf]
        %v312 = vld [vmem:[%s1 + $0x48] sm:$0xf]
        %v313 = vld [vmem:[%s1 + $0x4c] sm:$0xf]
        %v314 = vld [vmem:[%s1 + $0x50] sm:$0xf]
        %v315 = vld [vmem:[%s1 + $0x54] sm:$0xf]
        %v316 = vld [vmem:[%s1 + $0x58] sm:$0xf]
        %v317 = vld [vmem:[%s1 + $0x5c] sm:$0xf]
        %v318 = vld [vmem:[%s1 + $0x60] sm:$0xf]
        %v319 = vld [vmem:[%s1 + $0x64] sm:$0xf]
        %v320 = vld [vmem:[%s1 + $0x68] sm:$0xf]
        %v321 = vld [vmem:[%s1 + $0x6c] sm:$0xf]
        %v322 = vld [vmem:[%s1 + $0x70] sm:$0xf]
        %v323 = vld [vmem:[%s1 + $0x74] sm:$0xf]
        %v324 = vld [vmem:[%s1 + $0x78] sm:$0xf]
        %v325 = vld [vmem:[%s1 + $0x7c] sm:$0xf]
        %v326 = vld [vmem:[%s1 + $0x80] sm:$0xf]
        %v327 = vld [vmem:[%s1 + $0x84] sm:$0xf]
        %v328 = vld [vmem:[%s1 + $0x88] sm:$0xf]
        %v329 = vld [vmem:[%s1 + $0x8c] sm:$0xf]
        %v330 = vld [vmem:[%s1 + $0x90] sm:$0xf]
        %v331 = vld [vmem:[%s1 + $0x94] sm:$0xf]
        %v332 = vld [vmem:[%s1 + $0x98] sm:$0xf]
        %v333 = vld [vmem:[%s1 + $0x9c] sm:$0xf]
        %v334 = vld [vmem:[%s1 + $0xa0] sm:$0xf]
        %v335 = vld [vmem:[%s1 + $0xa4] sm:$0xf]
        %v336 = vld [vmem:[%s1 + $0xa8] sm:$0xf]
        %v337 = vld [vmem:[%s1 + $0xac] sm:$0xf]
        %v338 = vld [vmem:[%s1 + $0xb0] sm:$0xf]
        %v339 = vld [vmem:[%s1 + $0xb4] sm:$0xf]
        %v340 = vld [vmem:[%s1 + $0xb8] sm:$0xf]
        %v341 = vld [vmem:[%s1 + $0xbc] sm:$0xf]
        %v342 = vld [vmem:[%s1 + $0xc0] sm:$0xf]
        %v343 = vld [vmem:[%s1 + $0xc4] sm:$0xf]
        %v344 = vld [vmem:[%s1 + $0xc8] sm:$0xf]
        %v345 = vld [vmem:[%s1 + $0xcc] sm:$0xf]
        %v346 = vld [vmem:[%s1 + $0xd0] sm:$0xf]
        %v347 = vld [vmem:[%s1 + $0xd4] sm:$0xf]
        %v348 = vld [vmem:[%s1 + $0xd8] sm:$0xf]
        %v349 = vld [vmem:[%s1 + $0xdc] sm:$0xf]
        %v350 = vld [vmem:[%s1 + $0xe0] sm:$0xf]
        %v351 = vld [vmem:[%s1 + $0xe4] sm:$0xf]
        %v352 = vld [vmem:[%s1 + $0xe8] sm:$0xf]
        %v353 = vld [vmem:[%s1 + $0xec] sm:$0xf]
        %v354 = vld [vmem:[%s1 + $0xf0] sm:$0xf]
        %v355 = vld [vmem:[%s1 + $0xf4] sm:$0xf]
        %v356 = vld [vmem:[%s1 + $0xf8] sm:$0xf]
        %v357 = vld [vmem:[%s1 + $0xfc] sm:$0xf]
        %v358 = vld [vmem:[%s1 + $0x100] sm:$0xf]
        %v359 = vld [vmem:[%s1 + $0x104] sm:$0xf]
        %v360 = vld [vmem:[%s1 + $0x108] sm:$0xf]
        %v361 = vld [vmem:[%s1 + $0x10c] sm:$0xf]
        %v362 = vld [vmem:[%s1 + $0x110] sm:$0xf]
        %v363 = vld [vmem:[%s1 + $0x114] sm:$0xf]
        %v364 = vld [vmem:[%s1 + $0x118] sm:$0xf]
        %v365 = vld [vmem:[%s1 + $0x11c] sm:$0xf]
        %v366 = vld [vmem:[%s1 + $0x120] sm:$0xf]
        %v367 = vld [vmem:[%s1 + $0x124] sm:$0xf]
        %v368 = vld [vmem:[%s1 + $0x128] sm:$0xf]
        %v369 = vld [vmem:[%s1 + $0x12c] sm:$0xf]
        %v370 = vld [vmem:[%s1 + $0x130] sm:$0xf]
        %v371 = vld [vmem:[%s1 + $0x134] sm:$0xf]
        %v372 = vld [vmem:[%s1 + $0x138] sm:$0xf]
        %v373 = vld [vmem:[%s1 + $0x13c] sm:$0xf]
        %v374 = vld [vmem:[%s1 + $0x140] sm:$0xf]
        %v375 = vld [vmem:[%s1 + $0x144] sm:$0xf]
        %v376 = vld [vmem:[%s1 + $0x148] sm:$0xf]
        %v377 = vld [vmem:[%s1 + $0x14c] sm:$0xf]
        %v378 = vld [vmem:[%s1 + $0x150] sm:$0xf]
        %v379 = vld [vmem:[%s1 + $0x154] sm:$0xf]
        %v380 = vld [vmem:[%s1 + $0x158] sm:$0xf]
        %v381 = vld [vmem:[%s1 + $0x15c] sm:$0xf]
        %v382 = vld [vmem:[%s1 + $0x160] sm:$0xf]
        %v383 = vld [vmem:[%s1 + $0x164] sm:$0xf]
        %v384 = vld [vmem:[%s1 + $0x168] sm:$0xf]
        %v385 = vld [vmem:[%s1 + $0x16c] sm:$0xf]
        %v386 = vld [vmem:[%s1 + $0x170] sm:$0xf]
        %v387 = vld [vmem:[%s1 + $0x174] sm:$0xf]
        %v388 = vld [vmem:[%s1 + $0x178] sm:$0xf]
        %v389 = vld [vmem:[%s1 + $0x17c] sm:$0xf]
        %v390 = vld [vmem:[%s1 + $0x180] sm:$0xf]
        %v391 = vld [vmem:[%s1 + $0x184] sm:$0xf]
        %v392 = vld [vmem:[%s2] sm:$0x1]
        %v394 = vlaneseq
        %v395 = vshrl.u32 %v394, 7
        %v396 = vsub.s32 0, %v395
        %v397 = vrot.slane %v392, %v396
        %v463 = vunpack.c.l.b16 %v230
        %v464 = vunpack.c.h.b16 %v230
        %v465 = vunpack.c.l.b16 %v231
        %v466 = vunpack.c.h.b16 %v231
        %v467 = vunpack.c.l.b16 %v232
        %v468 = vunpack.c.h.b16 %v232
        %v469 = vunpack.c.l.b16 %v233
        %v470 = vunpack.c.l.b16 %v234
        %v471 = vunpack.c.h.b16 %v234
        %v472 = vunpack.c.l.b16 %v235
        %v473 = vunpack.c.h.b16 %v235
        %v474 = vunpack.c.l.b16 %v236
        %v475 = vunpack.c.h.b16 %v236
        %v476 = vunpack.c.l.b16 %v237
        %v477 = vunpack.c.l.b16 %v238
        %v478 = vunpack.c.h.b16 %v238
        %v479 = vunpack.c.l.b16 %v239
        %v480 = vunpack.c.h.b16 %v239
        %v481 = vunpack.c.l.b16 %v240
        %v482 = vunpack.c.h.b16 %v240
        %v483 = vunpack.c.l.b16 %v241
        %v484 = vunpack.c.l.b16 %v242
        %v485 = vunpack.c.h.b16 %v242
        %v486 = vunpack.c.l.b16 %v243
        %v487 = vunpack.c.h.b16 %v243
        %v488 = vunpack.c.l.b16 %v244
        %v489 = vunpack.c.h.b16 %v244
        %v490 = vunpack.c.l.b16 %v245
        %v491 = vunpack.c.l.b16 %v246
        %v492 = vunpack.c.h.b16 %v246
        %v493 = vunpack.c.l.b16 %v247
        %v494 = vunpack.c.h.b16 %v247
        %v495 = vunpack.c.l.b16 %v248
        %v496 = vunpack.c.h.b16 %v248
        %v497 = vunpack.c.l.b16 %v249
        %v498 = vunpack.c.l.b16 %v250
        %v499 = vunpack.c.h.b16 %v250
        %v500 = vunpack.c.l.b16 %v251
        %v501 = vunpack.c.h.b16 %v251
        %v502 = vunpack.c.l.b16 %v252
        %v503 = vunpack.c.h.b16 %v252
        %v504 = vunpack.c.l.b16 %v253
        %v505 = vunpack.c.l.b16 %v254
        %v506 = vunpack.c.h.b16 %v254
        %v507 = vunpack.c.l.b16 %v255
        %v508 = vunpack.c.h.b16 %v255
        %v509 = vunpack.c.l.b16 %v256
        %v510 = vunpack.c.h.b16 %v256
        %v511 = vunpack.c.l.b16 %v257
        %v512 = vunpack.c.l.b16 %v258
        %v513 = vunpack.c.h.b16 %v258
        %v514 = vunpack.c.l.b16 %v259
        %v515 = vunpack.c.h.b16 %v259
        %v516 = vunpack.c.l.b16 %v260
        %v517 = vunpack.c.h.b16 %v260
        %v518 = vunpack.c.l.b16 %v261
        %v519 = vunpack.c.l.b16 %v262
        %v520 = vunpack.c.h.b16 %v262
        %v521 = vunpack.c.l.b16 %v263
        %v522 = vunpack.c.h.b16 %v263
        %v523 = vunpack.c.l.b16 %v264
        %v524 = vunpack.c.h.b16 %v264
        %v525 = vunpack.c.l.b16 %v265
        %v526 = vunpack.c.l.b16 %v266
        %v527 = vunpack.c.h.b16 %v266
        %v528 = vunpack.c.l.b16 %v267
        %v529 = vunpack.c.h.b16 %v267
        %v530 = vunpack.c.l.b16 %v268
        %v531 = vunpack.c.h.b16 %v268
        %v532 = vunpack.c.l.b16 %v269
        %v533 = vunpack.c.l.b16 %v270
        %v534 = vunpack.c.h.b16 %v270
        %v535 = vunpack.c.l.b16 %v271
        %v536 = vunpack.c.h.b16 %v271
        %v537 = vunpack.c.l.b16 %v272
        %v538 = vunpack.c.h.b16 %v272
        %v539 = vunpack.c.l.b16 %v273
        %v540 = vunpack.c.l.b16 %v274
        %v541 = vunpack.c.h.b16 %v274
        %v542 = vunpack.c.l.b16 %v275
        %v543 = vunpack.c.h.b16 %v275
        %v544 = vunpack.c.l.b16 %v276
        %v545 = vunpack.c.h.b16 %v276
        %v546 = vunpack.c.l.b16 %v277
        %v547 = vunpack.c.l.b16 %v278
        %v548 = vunpack.c.h.b16 %v278
        %v549 = vunpack.c.l.b16 %v279
        %v550 = vunpack.c.h.b16 %v279
        %v551 = vunpack.c.l.b16 %v280
        %v552 = vunpack.c.h.b16 %v280
        %v553 = vunpack.c.l.b16 %v281
        %v554 = vunpack.c.l.b16 %v282
        %v555 = vunpack.c.h.b16 %v282
        %v556 = vunpack.c.l.b16 %v283
        %v557 = vunpack.c.h.b16 %v283
        %v558 = vunpack.c.l.b16 %v284
        %v559 = vunpack.c.h.b16 %v284
        %v560 = vunpack.c.l.b16 %v285
        %v561 = vunpack.c.l.b16 %v286
        %v562 = vunpack.c.h.b16 %v286
        %v563 = vunpack.c.l.b16 %v287
        %v564 = vunpack.c.h.b16 %v287
        %v565 = vunpack.c.l.b16 %v288
        %v566 = vunpack.c.h.b16 %v288
        %v567 = vunpack.c.l.b16 %v289
        %v568 = vunpack.c.l.b16 %v290
        %v569 = vunpack.c.h.b16 %v290
        %v570 = vunpack.c.l.b16 %v291
        %v571 = vunpack.c.h.b16 %v291
        %v572 = vunpack.c.l.b16 %v292
        %v573 = vunpack.c.h.b16 %v292
        %v574 = vunpack.c.l.b16 %v293
        %v575 = vpack.c.b16 %v470, %v463
        %v576 = vpack.c.b16 %v471, %v464
        %v577 = vpack.c.b16 %v472, %v465
        %v578 = vpack.c.b16 %v473, %v466
        %v579 = vpack.c.b16 %v474, %v467
        %v580 = vpack.c.b16 %v475, %v468
        %v581 = vpack.c.b16 %v476, %v469
        %v582 = vpack.c.b16 %v484, %v477
        %v583 = vpack.c.b16 %v485, %v478
        %v584 = vpack.c.b16 %v486, %v479
        %v585 = vpack.c.b16 %v487, %v480
        %v586 = vpack.c.b16 %v488, %v481
        %v587 = vpack.c.b16 %v489, %v482
        %v588 = vpack.c.b16 %v490, %v483
        %v589 = vpack.c.b16 %v498, %v491
        %v590 = vpack.c.b16 %v499, %v492
        %v591 = vpack.c.b16 %v500, %v493
        %v592 = vpack.c.b16 %v501, %v494
        %v593 = vpack.c.b16 %v502, %v495
        %v594 = vpack.c.b16 %v503, %v496
        %v595 = vpack.c.b16 %v504, %v497
        %v596 = vpack.c.b16 %v512, %v505
        %v597 = vpack.c.b16 %v513, %v506
        %v598 = vpack.c.b16 %v514, %v507
        %v599 = vpack.c.b16 %v515, %v508
        %v600 = vpack.c.b16 %v516, %v509
        %v601 = vpack.c.b16 %v517, %v510
        %v602 = vpack.c.b16 %v518, %v511
        %v603 = vpack.c.b16 %v526, %v519
        %v604 = vpack.c.b16 %v527, %v520
        %v605 = vpack.c.b16 %v528, %v521
        %v606 = vpack.c.b16 %v529, %v522
        %v607 = vpack.c.b16 %v530, %v523
        %v608 = vpack.c.b16 %v531, %v524
        %v609 = vpack.c.b16 %v532, %v525
        %v610 = vpack.c.b16 %v540, %v533
        %v611 = vpack.c.b16 %v541, %v534
        %v612 = vpack.c.b16 %v542, %v535
        %v613 = vpack.c.b16 %v543, %v536
        %v614 = vpack.c.b16 %v544, %v537
        %v615 = vpack.c.b16 %v545, %v538
        %v616 = vpack.c.b16 %v546, %v539
        %v617 = vpack.c.b16 %v554, %v547
        %v618 = vpack.c.b16 %v555, %v548
        %v619 = vpack.c.b16 %v556, %v549
        %v620 = vpack.c.b16 %v557, %v550
        %v621 = vpack.c.b16 %v558, %v551
        %v622 = vpack.c.b16 %v559, %v552
        %v623 = vpack.c.b16 %v560, %v553
        %v624 = vpack.c.b16 %v568, %v561
        %v625 = vpack.c.b16 %v569, %v562
        %v626 = vpack.c.b16 %v570, %v563
        %v627 = vpack.c.b16 %v571, %v564
        %v628 = vpack.c.b16 %v572, %v565
        %v629 = vpack.c.b16 %v573, %v566
        %v630 = vpack.c.b16 %v574, %v567
        %v777 = vunpack.c.l.b16 %v294
        %v778 = vunpack.c.l.b16 %v295
        %v779 = vunpack.c.l.b16 %v296
        %v780 = vunpack.c.l.b16 %v297
        %v781 = vunpack.c.l.b16 %v298
        %v782 = vunpack.c.l.b16 %v299
        %v783 = vunpack.c.l.b16 %v300
        %v784 = vunpack.c.l.b16 %v301
        %v785 = vunpack.c.l.b16 %v302
        %v786 = vunpack.c.l.b16 %v303
        %v787 = vunpack.c.l.b16 %v304
        %v788 = vunpack.c.l.b16 %v305
        %v789 = vunpack.c.l.b16 %v306
        %v790 = vunpack.c.l.b16 %v307
        %v791 = vunpack.c.l.b16 %v308
        %v792 = vunpack.c.l.b16 %v309
        %v793 = vunpack.c.l.b16 %v310
        %v794 = vunpack.c.l.b16 %v311
        %v795 = vunpack.c.l.b16 %v312
        %v796 = vunpack.c.l.b16 %v313
        %v797 = vunpack.c.l.b16 %v314
        %v798 = vunpack.c.l.b16 %v315
        %v799 = vunpack.c.l.b16 %v316
        %v800 = vunpack.c.l.b16 %v317
        %v801 = vunpack.c.l.b16 %v318
        %v802 = vunpack.c.l.b16 %v319
        %v803 = vunpack.c.l.b16 %v320
        %v804 = vunpack.c.l.b16 %v321
        %v805 = vunpack.c.l.b16 %v322
        %v806 = vunpack.c.l.b16 %v323
        %v807 = vunpack.c.l.b16 %v324
        %v808 = vunpack.c.l.b16 %v325
        %v809 = vunpack.c.l.b16 %v326
        %v810 = vunpack.c.l.b16 %v327
        %v811 = vunpack.c.l.b16 %v328
        %v812 = vunpack.c.l.b16 %v329
        %v813 = vunpack.c.l.b16 %v330
        %v814 = vunpack.c.l.b16 %v331
        %v815 = vunpack.c.l.b16 %v332
        %v816 = vunpack.c.l.b16 %v333
        %v817 = vunpack.c.l.b16 %v334
        %v818 = vunpack.c.l.b16 %v335
        %v819 = vunpack.c.l.b16 %v336
        %v820 = vunpack.c.l.b16 %v337
        %v821 = vunpack.c.l.b16 %v338
        %v822 = vunpack.c.l.b16 %v339
        %v823 = vunpack.c.l.b16 %v340
        %v824 = vunpack.c.l.b16 %v341
        %v825 = vunpack.c.l.b16 %v342
        %v826 = vunpack.c.l.b16 %v343
        %v827 = vunpack.c.l.b16 %v344
        %v828 = vunpack.c.l.b16 %v345
        %v829 = vunpack.c.l.b16 %v346
        %v830 = vunpack.c.l.b16 %v347
        %v831 = vunpack.c.l.b16 %v348
        %v832 = vunpack.c.l.b16 %v349
        %v833 = vunpack.c.l.b16 %v350
        %v834 = vunpack.c.l.b16 %v351
        %v835 = vunpack.c.l.b16 %v352
        %v836 = vunpack.c.l.b16 %v353
        %v837 = vunpack.c.l.b16 %v354
        %v838 = vunpack.c.l.b16 %v355
        %v839 = vunpack.c.l.b16 %v356
        %v840 = vunpack.c.l.b16 %v357
        %v841 = vunpack.c.l.b16 %v358
        %v842 = vunpack.c.l.b16 %v359
        %v843 = vunpack.c.l.b16 %v360
        %v844 = vunpack.c.l.b16 %v361
        %v845 = vunpack.c.l.b16 %v362
        %v846 = vunpack.c.l.b16 %v363
        %v847 = vunpack.c.l.b16 %v364
        %v848 = vunpack.c.l.b16 %v365
        %v849 = vunpack.c.l.b16 %v366
        %v850 = vunpack.c.l.b16 %v367
        %v851 = vunpack.c.l.b16 %v368
        %v852 = vunpack.c.l.b16 %v369
        %v853 = vunpack.c.l.b16 %v370
        %v854 = vunpack.c.l.b16 %v371
        %v855 = vunpack.c.l.b16 %v372
        %v856 = vunpack.c.l.b16 %v373
        %v857 = vunpack.c.l.b16 %v374
        %v858 = vunpack.c.l.b16 %v375
        %v859 = vunpack.c.l.b16 %v376
        %v860 = vunpack.c.l.b16 %v377
        %v861 = vunpack.c.l.b16 %v378
        %v862 = vunpack.c.l.b16 %v379
        %v863 = vunpack.c.l.b16 %v380
        %v864 = vunpack.c.l.b16 %v381
        %v865 = vunpack.c.l.b16 %v382
        %v866 = vunpack.c.l.b16 %v383
        %v867 = vunpack.c.l.b16 %v384
        %v868 = vunpack.c.l.b16 %v385
        %v869 = vunpack.c.l.b16 %v386
        %v870 = vunpack.c.l.b16 %v387
        %v871 = vunpack.c.l.b16 %v388
        %v872 = vunpack.c.l.b16 %v389
        %v873 = vunpack.c.l.b16 %v390
        %v874 = vunpack.c.l.b16 %v391
        %v875 = vpack.c.b16 %v778, %v777
        %v876 = vpack.c.b16 %v780, %v779
        %v877 = vpack.c.b16 %v782, %v781
        %v878 = vpack.c.b16 %v784, %v783
        %v879 = vpack.c.b16 %v786, %v785
        %v880 = vpack.c.b16 %v788, %v787
        %v881 = vpack.c.b16 %v790, %v789
        %v882 = vpack.c.b16 %v792, %v791
        %v883 = vpack.c.b16 %v794, %v793
        %v884 = vpack.c.b16 %v796, %v795
        %v885 = vpack.c.b16 %v798, %v797
        %v886 = vpack.c.b16 %v800, %v799
        %v887 = vpack.c.b16 %v802, %v801
        %v888 = vpack.c.b16 %v804, %v803
        %v889 = vpack.c.b16 %v806, %v805
        %v890 = vpack.c.b16 %v808, %v807
        %v891 = vpack.c.b16 %v810, %v809
        %v892 = vpack.c.b16 %v812, %v811
        %v893 = vpack.c.b16 %v814, %v813
        %v894 = vpack.c.b16 %v816, %v815
        %v895 = vpack.c.b16 %v818, %v817
        %v896 = vpack.c.b16 %v820, %v819
        %v897 = vpack.c.b16 %v822, %v821
        %v898 = vpack.c.b16 %v824, %v823
        %v899 = vpack.c.b16 %v826, %v825
        %v900 = vpack.c.b16 %v828, %v827
        %v901 = vpack.c.b16 %v830, %v829
        %v902 = vpack.c.b16 %v832, %v831
        %v903 = vpack.c.b16 %v834, %v833
        %v904 = vpack.c.b16 %v836, %v835
        %v905 = vpack.c.b16 %v838, %v837
        %v906 = vpack.c.b16 %v840, %v839
        %v907 = vpack.c.b16 %v842, %v841
        %v908 = vpack.c.b16 %v844, %v843
        %v909 = vpack.c.b16 %v846, %v845
        %v910 = vpack.c.b16 %v848, %v847
        %v911 = vpack.c.b16 %v850, %v849
        %v912 = vpack.c.b16 %v852, %v851
        %v913 = vpack.c.b16 %v854, %v853
        %v914 = vpack.c.b16 %v856, %v855
        %v915 = vpack.c.b16 %v858, %v857
        %v916 = vpack.c.b16 %v860, %v859
        %v917 = vpack.c.b16 %v862, %v861
        %v918 = vpack.c.b16 %v864, %v863
        %v919 = vpack.c.b16 %v866, %v865
        %v920 = vpack.c.b16 %v868, %v867
        %v921 = vpack.c.b16 %v870, %v869
        %v922 = vpack.c.b16 %v872, %v871
        %v923 = vpack.c.b16 %v874, %v873
        %vm973 = vcmask 130048
        %v975 = vsel %vm973, %v581, 0
        %v978 = vsel %vm973, %v588, 0
        %v981 = vsel %vm973, %v595, 0
        %v984 = vsel %vm973, %v602, 0
        %v987 = vsel %vm973, %v609, 0
        %v990 = vsel %vm973, %v616, 0
        %v993 = vsel %vm973, %v623, 0
        %v996 = vsel %vm973, %v630, 0
        %998 = vmatprep.subr.bf16.mxu0 0
        %999 = vmatpush1.bf16.msra.mxu0 %v875
        %1000 = vmatprep.subr.bf16.mxu0 0
        %1001 = vmatpush1.bf16.msra.mxu0 %v876
        %1002 = vmatprep.subr.bf16.mxu0 0
        %1003 = vmatpush1.bf16.msra.mxu0 %v877
        %1004 = vmatprep.subr.bf16.mxu0 0
        %1005 = vmatpush1.bf16.msra.mxu0 %v878
        %1006 = vmatprep.subr.bf16.mxu0 0
        %1007 = vmatpush1.bf16.msra.mxu0 %v879
        %1008 = vmatprep.subr.bf16.mxu0 0
        %1009 = vmatpush1.bf16.msra.mxu0 %v880
        %1010 = vmatprep.subr.bf16.mxu0 0
        %1011 = vmatpush1.bf16.msra.mxu0 %v881
        %1012 = vmatprep.subr.bf16.mxu0 0
        %1013 = vmatpush1.bf16.msra.mxu0 %v882
        %1014 = vmatprep.subr.bf16.mxu0 0
        %1015 = vmatpush1.bf16.msra.mxu0 %v883
        %1016 = vmatprep.subr.bf16.mxu0 0
        %1017 = vmatpush1.bf16.msra.mxu0 %v884
        %1018 = vmatprep.subr.bf16.mxu0 0
        %1019 = vmatpush1.bf16.msra.mxu0 %v885
        %1020 = vmatprep.subr.bf16.mxu0 0
        %1021 = vmatpush1.bf16.msra.mxu0 %v886
        %1022 = vmatprep.subr.bf16.mxu0 0
        %1023 = vmatpush1.bf16.msra.mxu0 %v887
        %1024 = vmatprep.subr.bf16.mxu0 0
        %1025 = vmatpush1.bf16.msra.mxu0 %v888
        %1026 = vmatprep.subr.bf16.mxu0 0
        %1027 = vmatpush1.bf16.msra.mxu0 %v889
        %1028 = vmatprep.subr.bf16.mxu0 0
        %1029 = vmatpush1.bf16.msra.mxu0 %v890
        %1030 = vmatprep.mubr.bf16.mxu0 %v576
        %1031 = vmatmul.mubr.bf16.gmra.mrb[0].mxu0 %v575
        %v1032 = vpop.f32.mrb[0].mxu0
        %v1033 = vadd.f32 %v397, %v1032
        %v1034 = vpop.f32.mrb[0].mxu0
        %v1035 = vpop.f32.mrb[0].mxu0
        %v1036 = vadd.f32 %v397, %v1035
        %v1037 = vpop.f32.mrb[0].mxu0
        %1038 = vmatprep.mubr.bf16.mxu0 %v583
        %1039 = vmatmul.mubr.bf16.gmra.mrb[0].mxu0 %v582
        %v1040 = vpop.f32.mrb[0].mxu0
        %v1041 = vadd.f32 %v397, %v1040
        %v1042 = vpop.f32.mrb[0].mxu0
        %v1043 = vpop.f32.mrb[0].mxu0
        %v1044 = vadd.f32 %v397, %v1043
        %v1045 = vpop.f32.mrb[0].mxu0
        %1046 = vmatprep.mubr.bf16.mxu0 %v590
        %1047 = vmatmul.mubr.bf16.gmra.mrb[0].mxu0 %v589
        %v1048 = vpop.f32.mrb[0].mxu0
        %v1049 = vadd.f32 %v397, %v1048
        %v1050 = vpop.f32.mrb[0].mxu0
        %v1051 = vpop.f32.mrb[0].mxu0
        %v1052 = vadd.f32 %v397, %v1051
        %v1053 = vpop.f32.mrb[0].mxu0
        %1054 = vmatprep.mubr.bf16.mxu0 %v597
        %1055 = vmatmul.mubr.bf16.gmra.mrb[0].mxu0 %v596
        %v1056 = vpop.f32.mrb[0].mxu0
        %v1057 = vadd.f32 %v397, %v1056
        %v1058 = vpop.f32.mrb[0].mxu0
        %v1059 = vpop.f32.mrb[0].mxu0
        %v1060 = vadd.f32 %v397, %v1059
        %v1061 = vpop.f32.mrb[0].mxu0
        %1062 = vmatprep.mubr.bf16.mxu0 %v604
        %1063 = vmatmul.mubr.bf16.gmra.mrb[0].mxu0 %v603
        %v1064 = vpop.f32.mrb[0].mxu0
        %v1065 = vadd.f32 %v397, %v1064
        %v1066 = vpop.f32.mrb[0].mxu0
        %v1067 = vpop.f32.mrb[0].mxu0
        %v1068 = vadd.f32 %v397, %v1067
        %v1069 = vpop.f32.mrb[0].mxu0
        %1070 = vmatprep.mubr.bf16.mxu0 %v611
        %1071 = vmatmul.mubr.bf16.gmra.mrb[0].mxu0 %v610
        %v1072 = vpop.f32.mrb[0].mxu0
        %v1073 = vadd.f32 %v397, %v1072
        %v1074 = vpop.f32.mrb[0].mxu0
        %v1075 = vpop.f32.mrb[0].mxu0
        %v1076 = vadd.f32 %v397, %v1075
        %v1077 = vpop.f32.mrb[0].mxu0
        %1078 = vmatprep.mubr.bf16.mxu0 %v618
        %1079 = vmatmul.mubr.bf16.gmra.mrb[0].mxu0 %v617
        %v1080 = vpop.f32.mrb[0].mxu0
        %v1081 = vadd.f32 %v397, %v1080
        %v1082 = vpop.f32.mrb[0].mxu0
        %v1083 = vpop.f32.mrb[0].mxu0
        %v1084 = vadd.f32 %v397, %v1083
        %v1085 = vpop.f32.mrb[0].mxu0
        %1086 = vmatprep.mubr.bf16.mxu0 %v625
        %1087 = vmatmul.mubr.bf16.gmra.mrb[0].mxu0 %v624
        %v1088 = vpop.f32.mrb[0].mxu0
        %v1089 = vadd.f32 %v397, %v1088
        %v1090 = vpop.f32.mrb[0].mxu0
        %v1091 = vpop.f32.mrb[0].mxu0
        %v1092 = vadd.f32 %v397, %v1091
        %v1093 = vpop.f32.mrb[0].mxu0
        %1094 = vdwg.mxu0
        %1095 = vmatprep.subr.bf16.mxu0 0
        %1096 = vmatpush1.bf16.msra.mxu0 %v891
        %1097 = vmatprep.subr.bf16.mxu0 0
        %1098 = vmatpush1.bf16.msra.mxu0 %v892
        %1099 = vmatprep.subr.bf16.mxu0 0
        %1100 = vmatpush1.bf16.msra.mxu0 %v893
        %1101 = vmatprep.subr.bf16.mxu0 0
        %1102 = vmatpush1.bf16.msra.mxu0 %v894
        %1103 = vmatprep.subr.bf16.mxu0 0
        %1104 = vmatpush1.bf16.msra.mxu0 %v895
        %1105 = vmatprep.subr.bf16.mxu0 0
        %1106 = vmatpush1.bf16.msra.mxu0 %v896
        %1107 = vmatprep.subr.bf16.mxu0 0
        %1108 = vmatpush1.bf16.msra.mxu0 %v897
        %1109 = vmatprep.subr.bf16.mxu0 0
        %1110 = vmatpush1.bf16.msra.mxu0 %v898
        %1111 = vmatprep.subr.bf16.mxu0 0
        %1112 = vmatpush1.bf16.msra.mxu0 %v899
        %1113 = vmatprep.subr.bf16.mxu0 0
        %1114 = vmatpush1.bf16.msra.mxu0 %v900
        %1115 = vmatprep.subr.bf16.mxu0 0
        %1116 = vmatpush1.bf16.msra.mxu0 %v901
        %1117 = vmatprep.subr.bf16.mxu0 0
        %1118 = vmatpush1.bf16.msra.mxu0 %v902
        %1119 = vmatprep.subr.bf16.mxu0 0
        %1120 = vmatpush1.bf16.msra.mxu0 %v903
        %1121 = vmatprep.subr.bf16.mxu0 0
        %1122 = vmatpush1.bf16.msra.mxu0 %v904
        %1123 = vmatprep.subr.bf16.mxu0 0
        %1124 = vmatpush1.bf16.msra.mxu0 %v905
        %1125 = vmatprep.subr.bf16.mxu0 0
        %1126 = vmatpush1.bf16.msra.mxu0 %v906
        %1127 = vmatprep.mubr.bf16.mxu0 %v578
        %1128 = vmatmul.mubr.bf16.gmra.mrb[0].mxu0 %v577
        %v1129 = vpop.f32.mrb[0].mxu0
        %v1130 = vadd.f32 %v1033, %v1129
        %v1131 = vpop.f32.mrb[0].mxu0
        %v1132 = vpop.f32.mrb[0].mxu0
        %v1133 = vadd.f32 %v1036, %v1132
        %v1134 = vpop.f32.mrb[0].mxu0
        %1135 = vmatprep.mubr.bf16.mxu0 %v585
        %1136 = vmatmul.mubr.bf16.gmra.mrb[0].mxu0 %v584
        %v1137 = vpop.f32.mrb[0].mxu0
        %v1138 = vadd.f32 %v1041, %v1137
        %v1139 = vpop.f32.mrb[0].mxu0
        %v1140 = vpop.f32.mrb[0].mxu0
        %v1141 = vadd.f32 %v1044, %v1140
        %v1142 = vpop.f32.mrb[0].mxu0
        %1143 = vmatprep.mubr.bf16.mxu0 %v592
        %1144 = vmatmul.mubr.bf16.gmra.mrb[0].mxu0 %v591
        %v1145 = vpop.f32.mrb[0].mxu0
        %v1146 = vadd.f32 %v1049, %v1145
        %v1147 = vpop.f32.mrb[0].mxu0
        %v1148 = vpop.f32.mrb[0].mxu0
        %v1149 = vadd.f32 %v1052, %v1148
        %v1150 = vpop.f32.mrb[0].mxu0
        %1151 = vmatprep.mubr.bf16.mxu0 %v599
        %1152 = vmatmul.mubr.bf16.gmra.mrb[0].mxu0 %v598
        %v1153 = vpop.f32.mrb[0].mxu0
        %v1154 = vadd.f32 %v1057, %v1153
        %v1155 = vpop.f32.mrb[0].mxu0
        %v1156 = vpop.f32.mrb[0].mxu0
        %v1157 = vadd.f32 %v1060, %v1156
        %v1158 = vpop.f32.mrb[0].mxu0
        %1159 = vmatprep.mubr.bf16.mxu0 %v606
        %1160 = vmatmul.mubr.bf16.gmra.mrb[0].mxu0 %v605
        %v1161 = vpop.f32.mrb[0].mxu0
        %v1162 = vadd.f32 %v1065, %v1161
        %v1163 = vpop.f32.mrb[0].mxu0
        %v1164 = vpop.f32.mrb[0].mxu0
        %v1165 = vadd.f32 %v1068, %v1164
        %v1166 = vpop.f32.mrb[0].mxu0
        %1167 = vmatprep.mubr.bf16.mxu0 %v613
        %1168 = vmatmul.mubr.bf16.gmra.mrb[0].mxu0 %v612
        %v1169 = vpop.f32.mrb[0].mxu0
        %v1170 = vadd.f32 %v1073, %v1169
        %v1171 = vpop.f32.mrb[0].mxu0
        %v1172 = vpop.f32.mrb[0].mxu0
        %v1173 = vadd.f32 %v1076, %v1172
        %v1174 = vpop.f32.mrb[0].mxu0
        %1175 = vmatprep.mubr.bf16.mxu0 %v620
        %1176 = vmatmul.mubr.bf16.gmra.mrb[0].mxu0 %v619
        %v1177 = vpop.f32.mrb[0].mxu0
        %v1178 = vadd.f32 %v1081, %v1177
        %v1179 = vpop.f32.mrb[0].mxu0
        %v1180 = vpop.f32.mrb[0].mxu0
        %v1181 = vadd.f32 %v1084, %v1180
        %v1182 = vpop.f32.mrb[0].mxu0
        %1183 = vmatprep.mubr.bf16.mxu0 %v627
        %1184 = vmatmul.mubr.bf16.gmra.mrb[0].mxu0 %v626
        %v1185 = vpop.f32.mrb[0].mxu0
        %v1186 = vadd.f32 %v1089, %v1185
        %v1187 = vpop.f32.mrb[0].mxu0
        %v1188 = vpop.f32.mrb[0].mxu0
        %v1189 = vadd.f32 %v1092, %v1188
        %v1190 = vpop.f32.mrb[0].mxu0
        %1191 = vdwg.mxu0
        %1192 = vmatprep.subr.bf16.mxu0 0
        %1193 = vmatpush1.bf16.msra.mxu0 %v907
        %1194 = vmatprep.subr.bf16.mxu0 0
        %1195 = vmatpush1.bf16.msra.mxu0 %v908
        %1196 = vmatprep.subr.bf16.mxu0 0
        %1197 = vmatpush1.bf16.msra.mxu0 %v909
        %1198 = vmatprep.subr.bf16.mxu0 0
        %1199 = vmatpush1.bf16.msra.mxu0 %v910
        %1200 = vmatprep.subr.bf16.mxu0 0
        %1201 = vmatpush1.bf16.msra.mxu0 %v911
        %1202 = vmatprep.subr.bf16.mxu0 0
        %1203 = vmatpush1.bf16.msra.mxu0 %v912
        %1204 = vmatprep.subr.bf16.mxu0 0
        %1205 = vmatpush1.bf16.msra.mxu0 %v913
        %1206 = vmatprep.subr.bf16.mxu0 0
        %1207 = vmatpush1.bf16.msra.mxu0 %v914
        %1208 = vmatprep.subr.bf16.mxu0 0
        %1209 = vmatpush1.bf16.msra.mxu0 %v915
        %1210 = vmatprep.subr.bf16.mxu0 0
        %1211 = vmatpush1.bf16.msra.mxu0 %v916
        %1212 = vmatprep.subr.bf16.mxu0 0
        %1213 = vmatpush1.bf16.msra.mxu0 %v917
        %1214 = vmatprep.subr.bf16.mxu0 0
        %1215 = vmatpush1.bf16.msra.mxu0 %v918
        %1216 = vmatprep.subr.bf16.mxu0 0
        %1217 = vmatpush1.bf16.msra.mxu0 %v919
        %1218 = vmatprep.subr.bf16.mxu0 0
        %1219 = vmatpush1.bf16.msra.mxu0 %v920
        %1220 = vmatprep.subr.bf16.mxu0 0
        %1221 = vmatpush1.bf16.msra.mxu0 %v921
        %1222 = vmatprep.subr.bf16.mxu0 0
        %1223 = vmatpush1.bf16.msra.mxu0 %v922
        %1224 = vmatprep.mubr.bf16.mxu0 %v580
        %1225 = vmatmul.mubr.bf16.gmra.mrb[0].mxu0 %v579
        %v1226 = vpop.f32.mrb[0].mxu0
        %v1227 = vadd.f32 %v1130, %v1226
        %v1228 = vpop.f32.mrb[0].mxu0
        %v1229 = vpop.f32.mrb[0].mxu0
        %v1230 = vadd.f32 %v1133, %v1229
        %v1231 = vpop.f32.mrb[0].mxu0
        %1232 = vmatprep.mubr.bf16.mxu0 %v587
        %1233 = vmatmul.mubr.bf16.gmra.mrb[0].mxu0 %v586
        %v1234 = vpop.f32.mrb[0].mxu0
        %v1235 = vadd.f32 %v1138, %v1234
        %v1236 = vpop.f32.mrb[0].mxu0
        %v1237 = vpop.f32.mrb[0].mxu0
        %v1238 = vadd.f32 %v1141, %v1237
        %v1239 = vpop.f32.mrb[0].mxu0
        %1240 = vmatprep.mubr.bf16.mxu0 %v594
        %1241 = vmatmul.mubr.bf16.gmra.mrb[0].mxu0 %v593
        %v1242 = vpop.f32.mrb[0].mxu0
        %v1243 = vadd.f32 %v1146, %v1242
        %v1244 = vpop.f32.mrb[0].mxu0
        %v1245 = vpop.f32.mrb[0].mxu0
        %v1246 = vadd.f32 %v1149, %v1245
        %v1247 = vpop.f32.mrb[0].mxu0
        %1248 = vmatprep.mubr.bf16.mxu0 %v601
        %1249 = vmatmul.mubr.bf16.gmra.mrb[0].mxu0 %v600
        %v1250 = vpop.f32.mrb[0].mxu0
        %v1251 = vadd.f32 %v1154, %v1250
        %v1252 = vpop.f32.mrb[0].mxu0
        %v1253 = vpop.f32.mrb[0].mxu0
        %v1254 = vadd.f32 %v1157, %v1253
        %v1255 = vpop.f32.mrb[0].mxu0
        %1256 = vmatprep.mubr.bf16.mxu0 %v608
        %1257 = vmatmul.mubr.bf16.gmra.mrb[0].mxu0 %v607
        %v1258 = vpop.f32.mrb[0].mxu0
        %v1259 = vadd.f32 %v1162, %v1258
        %v1260 = vpop.f32.mrb[0].mxu0
        %v1261 = vpop.f32.mrb[0].mxu0
        %v1262 = vadd.f32 %v1165, %v1261
        %v1263 = vpop.f32.mrb[0].mxu0
        %1264 = vmatprep.mubr.bf16.mxu0 %v615
        %1265 = vmatmul.mubr.bf16.gmra.mrb[0].mxu0 %v614
        %v1266 = vpop.f32.mrb[0].mxu0
        %v1267 = vadd.f32 %v1170, %v1266
        %v1268 = vpop.f32.mrb[0].mxu0
        %v1269 = vpop.f32.mrb[0].mxu0
        %v1270 = vadd.f32 %v1173, %v1269
        %v1271 = vpop.f32.mrb[0].mxu0
        %1272 = vmatprep.mubr.bf16.mxu0 %v622
        %1273 = vmatmul.mubr.bf16.gmra.mrb[0].mxu0 %v621
        %v1274 = vpop.f32.mrb[0].mxu0
        %v1275 = vadd.f32 %v1178, %v1274
        %v1276 = vpop.f32.mrb[0].mxu0
        %v1277 = vpop.f32.mrb[0].mxu0
        %v1278 = vadd.f32 %v1181, %v1277
        %v1279 = vpop.f32.mrb[0].mxu0
        %1280 = vmatprep.mubr.bf16.mxu0 %v629
        %1281 = vmatmul.mubr.bf16.gmra.mrb[0].mxu0 %v628
        %v1282 = vpop.f32.mrb[0].mxu0
        %v1283 = vadd.f32 %v1186, %v1282
        %v1284 = vpop.f32.mrb[0].mxu0
        %v1285 = vpop.f32.mrb[0].mxu0
        %v1286 = vadd.f32 %v1189, %v1285
        %v1287 = vpop.f32.mrb[0].mxu0
        %1288 = vdwg.mxu0
        %1289 = vmatprep.subr.bf16.mxu0 0
        %1290 = vmatpush1.bf16.msra.mxu0 %v923
        %1291 = vmatprep.subr.bf16.mxu0 0
        %1292 = vmatpush1.bf16.msra.mxu0 0
        %1293 = vmatprep.subr.bf16.mxu0 0
        %1294 = vmatpush1.bf16.msra.mxu0 0
        %1295 = vmatprep.subr.bf16.mxu0 0
        %1296 = vmatpush1.bf16.msra.mxu0 0
        %1297 = vmatprep.subr.bf16.mxu0 0
        %1298 = vmatpush1.bf16.msra.mxu0 0
        %1299 = vmatprep.subr.bf16.mxu0 0
        %1300 = vmatpush1.bf16.msra.mxu0 0
        %1301 = vmatprep.subr.bf16.mxu0 0
        %1302 = vmatpush1.bf16.msra.mxu0 0
        %1303 = vmatprep.subr.bf16.mxu0 0
        %1304 = vmatpush1.bf16.msra.mxu0 0
        %1305 = vmatprep.subr.bf16.mxu0 0
        %1306 = vmatpush1.bf16.msra.mxu0 0
        %1307 = vmatprep.subr.bf16.mxu0 0
        %1308 = vmatpush1.bf16.msra.mxu0 0
        %1309 = vmatprep.subr.bf16.mxu0 0
        %1310 = vmatpush1.bf16.msra.mxu0 0
        %1311 = vmatprep.subr.bf16.mxu0 0
        %1312 = vmatpush1.bf16.msra.mxu0 0
        %1313 = vmatprep.subr.bf16.mxu0 0
        %1314 = vmatpush1.bf16.msra.mxu0 0
        %1315 = vmatprep.subr.bf16.mxu0 0
        %1316 = vmatpush1.bf16.msra.mxu0 0
        %1317 = vmatprep.subr.bf16.mxu0 0
        %1318 = vmatpush1.bf16.msra.mxu0 0
        %1319 = vmatprep.subr.bf16.mxu0 0
        %1320 = vmatpush1.bf16.msra.mxu0 0
        %1321 = vmatprep.mubr.bf16.mxu0 0
        %1322 = vmatmul.mubr.bf16.gmra.mrb[0].mxu0 %v975
        %v1323 = vpop.f32.mrb[0].mxu0
        %v1324 = vadd.f32 %v1227, %v1323
        %v1325 = vpop.f32.mrb[0].mxu0
        %v1326 = vpop.f32.mrb[0].mxu0
        %v1327 = vadd.f32 %v1230, %v1326
        %v1328 = vpop.f32.mrb[0].mxu0
        %1329 = vmatprep.mubr.bf16.mxu0 0
        %1330 = vmatmul.mubr.bf16.gmra.mrb[0].mxu0 %v978
        %v1331 = vpop.f32.mrb[0].mxu0
        %v1332 = vadd.f32 %v1235, %v1331
        %v1333 = vpop.f32.mrb[0].mxu0
        %v1334 = vpop.f32.mrb[0].mxu0
        %v1335 = vadd.f32 %v1238, %v1334
        %v1336 = vpop.f32.mrb[0].mxu0
        %1337 = vmatprep.mubr.bf16.mxu0 0
        %1338 = vmatmul.mubr.bf16.gmra.mrb[0].mxu0 %v981
        %v1339 = vpop.f32.mrb[0].mxu0
        %v1340 = vadd.f32 %v1243, %v1339
        %v1341 = vpop.f32.mrb[0].mxu0
        %v1342 = vpop.f32.mrb[0].mxu0
        %v1343 = vadd.f32 %v1246, %v1342
        %v1344 = vpop.f32.mrb[0].mxu0
        %1345 = vmatprep.mubr.bf16.mxu0 0
        %1346 = vmatmul.mubr.bf16.gmra.mrb[0].mxu0 %v984
        %v1347 = vpop.f32.mrb[0].mxu0
        %v1348 = vadd.f32 %v1251, %v1347
        %v1349 = vpop.f32.mrb[0].mxu0
        %v1350 = vpop.f32.mrb[0].mxu0
        %v1351 = vadd.f32 %v1254, %v1350
        %v1352 = vpop.f32.mrb[0].mxu0
        %1353 = vmatprep.mubr.bf16.mxu0 0
        %1354 = vmatmul.mubr.bf16.gmra.mrb[0].mxu0 %v987
        %v1355 = vpop.f32.mrb[0].mxu0
        %v1356 = vadd.f32 %v1259, %v1355
        %v1357 = vpop.f32.mrb[0].mxu0
        %v1358 = vpop.f32.mrb[0].mxu0
        %v1359 = vadd.f32 %v1262, %v1358
        %v1360 = vpop.f32.mrb[0].mxu0
        %1361 = vmatprep.mubr.bf16.mxu0 0
        %1362 = vmatmul.mubr.bf16.gmra.mrb[0].mxu0 %v990
        %v1363 = vpop.f32.mrb[0].mxu0
        %v1364 = vadd.f32 %v1267, %v1363
        %v1365 = vpop.f32.mrb[0].mxu0
        %v1366 = vpop.f32.mrb[0].mxu0
        %v1367 = vadd.f32 %v1270, %v1366
        %v1368 = vpop.f32.mrb[0].mxu0
        %1369 = vmatprep.mubr.bf16.mxu0 0
        %1370 = vmatmul.mubr.bf16.gmra.mrb[0].mxu0 %v993
        %v1371 = vpop.f32.mrb[0].mxu0
        %v1372 = vadd.f32 %v1275, %v1371
        %v1373 = vpop.f32.mrb[0].mxu0
        %v1374 = vpop.f32.mrb[0].mxu0
        %v1375 = vadd.f32 %v1278, %v1374
        %v1376 = vpop.f32.mrb[0].mxu0
        %1377 = vmatprep.mubr.bf16.mxu0 0
        %1378 = vmatmul.mubr.bf16.gmra.mrb[0].mxu0 %v996
        %v1379 = vpop.f32.mrb[0].mxu0
        %v1380 = vadd.f32 %v1283, %v1379
        %v1381 = vpop.f32.mrb[0].mxu0
        %v1382 = vpop.f32.mrb[0].mxu0
        %v1383 = vadd.f32 %v1286, %v1382
        %v1384 = vpop.f32.mrb[0].mxu0
        %1385 = vdwg.mxu0
        %v1386 = vmax.f32 %v1324, 0.0
        %v1387 = vmax.f32 %v1327, 0.0
        %v1388 = vmax.f32 %v1332, 0.0
        %v1389 = vmax.f32 %v1335, 0.0
        %v1390 = vmax.f32 %v1340, 0.0
        %v1391 = vmax.f32 %v1343, 0.0
        %v1392 = vmax.f32 %v1348, 0.0
        %v1393 = vmax.f32 %v1351, 0.0
        %v1394 = vmax.f32 %v1356, 0.0
        %v1395 = vmax.f32 %v1359, 0.0
        %v1396 = vmax.f32 %v1364, 0.0
        %v1397 = vmax.f32 %v1367, 0.0
        %v1398 = vmax.f32 %v1372, 0.0
        %v1399 = vmax.f32 %v1375, 0.0
        %v1400 = vmax.f32 %v1380, 0.0
        %v1401 = vmax.f32 %v1383, 0.0
        %v1402 = vpack.c.bf16 %v1387, %v1386
        %v1403 = vpack.c.bf16 %v1389, %v1388
        %v1404 = vpack.c.bf16 %v1391, %v1390
        %v1405 = vpack.c.bf16 %v1393, %v1392
        %v1406 = vpack.c.bf16 %v1395, %v1394
        %v1407 = vpack.c.bf16 %v1397, %v1396
        %v1408 = vpack.c.bf16 %v1399, %v1398
        %v1409 = vpack.c.bf16 %v1401, %v1400
        %v1410 = vld [vmem:[%s3] sm:$0xf]
        %v1411 = vld [vmem:[%s3 + $0x4] sm:$0xf]
        %v1412 = vld [vmem:[%s3 + $0x8] sm:$0xf]
        %v1413 = vld [vmem:[%s3 + $0xc] sm:$0xf]
        %v1414 = vld [vmem:[%s4] sm:$0x1]
        %v1416 = vlaneseq
        %v1417 = vshrl.u32 %v1416, 7
        %v1418 = vsub.s32 0, %v1417
        %v1419 = vrot.slane %v1414, %v1418
        %v1425 = vunpack.c.l.b16 %v1410
        %v1426 = vunpack.c.l.b16 %v1411
        %v1427 = vunpack.c.l.b16 %v1412
        %v1428 = vunpack.c.l.b16 %v1413
        %v1429 = vpack.c.b16 %v1426, %v1425
        %v1430 = vpack.c.b16 %v1428, %v1427
        %vm1433 = vcmask 261120
        %v1435 = vsel %vm1433, %v1402, 0
        %v1438 = vsel %vm1433, %v1403, 0
        %v1441 = vsel %vm1433, %v1404, 0
        %v1444 = vsel %vm1433, %v1405, 0
        %v1447 = vsel %vm1433, %v1406, 0
        %v1450 = vsel %vm1433, %v1407, 0
        %v1453 = vsel %vm1433, %v1408, 0
        %v1456 = vsel %vm1433, %v1409, 0
        %1458 = vmatprep.subr.bf16.mxu0 0
        %1459 = vmatpush1.bf16.msra.mxu0 %v1429
        %1460 = vmatprep.subr.bf16.mxu0 0
        %1461 = vmatpush1.bf16.msra.mxu0 %v1430
        %1462 = vmatprep.subr.bf16.mxu0 0
        %1463 = vmatpush1.bf16.msra.mxu0 0
        %1464 = vmatprep.subr.bf16.mxu0 0
        %1465 = vmatpush1.bf16.msra.mxu0 0
        %1466 = vmatprep.subr.bf16.mxu0 0
        %1467 = vmatpush1.bf16.msra.mxu0 0
        %1468 = vmatprep.subr.bf16.mxu0 0
        %1469 = vmatpush1.bf16.msra.mxu0 0
        %1470 = vmatprep.subr.bf16.mxu0 0
        %1471 = vmatpush1.bf16.msra.mxu0 0
        %1472 = vmatprep.subr.bf16.mxu0 0
        %1473 = vmatpush1.bf16.msra.mxu0 0
        %1474 = vmatprep.subr.bf16.mxu0 0
        %1475 = vmatpush1.bf16.msra.mxu0 0
        %1476 = vmatprep.subr.bf16.mxu0 0
        %1477 = vmatpush1.bf16.msra.mxu0 0
        %1478 = vmatprep.subr.bf16.mxu0 0
        %1479 = vmatpush1.bf16.msra.mxu0 0
        %1480 = vmatprep.subr.bf16.mxu0 0
        %1481 = vmatpush1.bf16.msra.mxu0 0
        %1482 = vmatprep.subr.bf16.mxu0 0
        %1483 = vmatpush1.bf16.msra.mxu0 0
        %1484 = vmatprep.subr.bf16.mxu0 0
        %1485 = vmatpush1.bf16.msra.mxu0 0
        %1486 = vmatprep.subr.bf16.mxu0 0
        %1487 = vmatpush1.bf16.msra.mxu0 0
        %1488 = vmatprep.subr.bf16.mxu0 0
        %1489 = vmatpush1.bf16.msra.mxu0 0
        %1490 = vmatprep.mubr.bf16.mxu0 0
        %1491 = vmatmul.mubr.bf16.gmra.mrb[0].mxu0 %v1435
        %v1492 = vpop.f32.mrb[0].mxu0
        %v1493 = vadd.f32 %v1419, %v1492
        %v1494 = vpop.f32.mrb[0].mxu0
        %v1495 = vpop.f32.mrb[0].mxu0
        %v1496 = vadd.f32 %v1419, %v1495
        %v1497 = vpop.f32.mrb[0].mxu0
        %1498 = vmatprep.mubr.bf16.mxu0 0
        %1499 = vmatmul.mubr.bf16.gmra.mrb[0].mxu0 %v1438
        %v1500 = vpop.f32.mrb[0].mxu0
        %v1501 = vadd.f32 %v1419, %v1500
        %v1502 = vpop.f32.mrb[0].mxu0
        %v1503 = vpop.f32.mrb[0].mxu0
        %v1504 = vadd.f32 %v1419, %v1503
        %v1505 = vpop.f32.mrb[0].mxu0
        %1506 = vmatprep.mubr.bf16.mxu0 0
        %1507 = vmatmul.mubr.bf16.gmra.mrb[0].mxu0 %v1441
        %v1508 = vpop.f32.mrb[0].mxu0
        %v1509 = vadd.f32 %v1419, %v1508
        %v1510 = vpop.f32.mrb[0].mxu0
        %v1511 = vpop.f32.mrb[0].mxu0
        %v1512 = vadd.f32 %v1419, %v1511
        %v1513 = vpop.f32.mrb[0].mxu0
        %1514 = vmatprep.mubr.bf16.mxu0 0
        %1515 = vmatmul.mubr.bf16.gmra.mrb[0].mxu0 %v1444
        %v1516 = vpop.f32.mrb[0].mxu0
        %v1517 = vadd.f32 %v1419, %v1516
        %v1518 = vpop.f32.mrb[0].mxu0
        %v1519 = vpop.f32.mrb[0].mxu0
        %v1520 = vadd.f32 %v1419, %v1519
        %v1521 = vpop.f32.mrb[0].mxu0
        %1522 = vmatprep.mubr.bf16.mxu0 0
        %1523 = vmatmul.mubr.bf16.gmra.mrb[0].mxu0 %v1447
        %v1524 = vpop.f32.mrb[0].mxu0
        %v1525 = vadd.f32 %v1419, %v1524
        %v1526 = vpop.f32.mrb[0].mxu0
        %v1527 = vpop.f32.mrb[0].mxu0
        %v1528 = vadd.f32 %v1419, %v1527
        %v1529 = vpop.f32.mrb[0].mxu0
        %1530 = vmatprep.mubr.bf16.mxu0 0
        %1531 = vmatmul.mubr.bf16.gmra.mrb[0].mxu0 %v1450
        %v1532 = vpop.f32.mrb[0].mxu0
        %v1533 = vadd.f32 %v1419, %v1532
        %v1534 = vpop.f32.mrb[0].mxu0
        %v1535 = vpop.f32.mrb[0].mxu0
        %v1536 = vadd.f32 %v1419, %v1535
        %v1537 = vpop.f32.mrb[0].mxu0
        %1538 = vmatprep.mubr.bf16.mxu0 0
        %1539 = vmatmul.mubr.bf16.gmra.mrb[0].mxu0 %v1453
        %v1540 = vpop.f32.mrb[0].mxu0
        %v1541 = vadd.f32 %v1419, %v1540
        %v1542 = vpop.f32.mrb[0].mxu0
        %v1543 = vpop.f32.mrb[0].mxu0
        %v1544 = vadd.f32 %v1419, %v1543
        %v1545 = vpop.f32.mrb[0].mxu0
        %1546 = vmatprep.mubr.bf16.mxu0 0
        %1547 = vmatmul.mubr.bf16.gmra.mrb[0].mxu0 %v1456
        %v1548 = vpop.f32.mrb[0].mxu0
        %v1549 = vadd.f32 %v1419, %v1548
        %v1550 = vpop.f32.mrb[0].mxu0
        %v1551 = vpop.f32.mrb[0].mxu0
        %v1552 = vadd.f32 %v1419, %v1551
        %v1553 = vpop.f32.mrb[0].mxu0
        %1554 = vdwg.mxu0
        %1555 = vst [vmem:[%s220] sm:$0xff] %v1493
        %1556 = vst [vmem:[%s220 + $0x8] sm:$0xff] %v1496
        %1557 = vst [vmem:[%s220 + $0x10] sm:$0xff] %v1501
        %1558 = vst [vmem:[%s220 + $0x18] sm:$0xff] %v1504
        %1559 = vst [vmem:[%s220 + $0x20] sm:$0xff] %v1509
        %1560 = vst [vmem:[%s220 + $0x28] sm:$0xff] %v1512
        %1561 = vst [vmem:[%s220 + $0x30] sm:$0xff] %v1517
        %1562 = vst [vmem:[%s220 + $0x38] sm:$0xff] %v1520
        %1563 = vst [vmem:[%s220 + $0x40] sm:$0xff] %v1525
        %1564 = vst [vmem:[%s220 + $0x48] sm:$0xff] %v1528
        %1565 = vst [vmem:[%s220 + $0x50] sm:$0xff] %v1533
        %1566 = vst [vmem:[%s220 + $0x58] sm:$0xff] %v1536
        %1567 = vst [vmem:[%s220 + $0x60] sm:$0xff] %v1541
        %1568 = vst [vmem:[%s220 + $0x68] sm:$0xff] %v1544
        %1569 = vst [vmem:[%s220 + $0x70] sm:$0xff] %v1549
        %1570 = vst [vmem:[%s220 + $0x78] sm:$0xff] %v1552
        %s1571 = sand.u32 %s137, 1
        %s1572 = scalar_lea.sflag [#allocation3], %s1571
        %s1573 = sand.u32 %s137, 1
        %s1574 = smul.addr %s1573, 128
        %s1575 = scalar_lea.vmem [#allocation2], %s1574
        // Predicated region
        $region41: #{tpu_custom_call.1} parent=39 // pred_check
          %p1576 = pneg %p147
        $region42: #{tpu_custom_call.1} parent=39 // pred_check_branch
          %1578 = sbr.rel (%p1576) target = $region44
        $region43: #{tpu_custom_call.1} parent=39 // pred_region
          %s1579 = smul.u32 16, %s19
          %s1581 = ssub.s32 2048, 2048
          %1582 = vsyncadd %s1572, %s1581
          %s1583 = smul.addr %s1579, 128
          %s1584 = scalar_lea.hbm %s5, %s1583
          %s1585 = sshll.u32 %s1575, 4
          %s1586 = int_to_ptr.vmem [resolvable:$true] %s1585
          %1591 = dma.vmem_to_hbm [thread:$0]  %s1586, 2048, %s1584, %s1572, 128, 128, 8
        $region44: #{tpu_custom_call.1} parent=39 // pred_fallthru
          _
      $region40: #{tpu_custom_call.1} parent=5 // pred_fallthru
        _
      %p1592 = scmp.le.s32.totalorder 2, %s14
      // Predicated region
      $region45: #{tpu_custom_call.1} parent=5 // pred_check
        %p1593 = pneg %p1592
      $region46: #{tpu_custom_call.1} parent=5 // pred_check_branch
        %1595 = sbr.rel (%p1593) target = $region48
      $region47: #{tpu_custom_call.1} parent=5 // pred_region
        %s1596 = ssub.s32 %s14, 2
        // Predicated region
        $region49: #{tpu_custom_call.1} parent=47 // pred_check
          %p1597 = pneg %p153
        $region50: #{tpu_custom_call.1} parent=47 // pred_check_branch
          %1599 = sbr.rel (%p1597) target = $region52
        $region51: #{tpu_custom_call.1} parent=47 // pred_region
          %s1600 = sand.u32 %s138, 1
          %s1601 = scalar_lea.sflag [#allocation3], %s1600
          %s1602 = sand.u32 %s138, 1
          %s1603 = smul.addr %s1602, 128
          %s1604 = scalar_lea.vmem [#allocation2], %s1603
          %1605 = dma.done %s1601, 2048
        $region52: #{tpu_custom_call.1} parent=47 // pred_fallthru
          _
      $region48: #{tpu_custom_call.1} parent=5 // pred_fallthru
        _
    $region6: #{tpu_custom_call.1} parent=1 // loop_footer
      %s18 = sadd.s32 1, %s14
    $region7: #{tpu_custom_call.1} parent=1 // loop_footer_branch
      %13 = sbr.rel target = $region3
    $region8: #{tpu_custom_call.1} parent=1 // loop_exit
      _
    %1606 = vsyncpa [#allocation3], 1
    %s1607 = scalar_lea.sflag [#allocation3], 1
    %1608 = vsyncpa %s1607, 1

</llo_original>
